<compile_context>
chip_gen: v6e
topology: v6e:2x2x1
jax: 0.10.0
libtpu: 0.0.40
codegen_flags: <defaults>
</compile_context>

<pallas_src>
import functools
import math
import random

import numpy as np
import jax
import jax.numpy as jnp
from jax.experimental import pallas as pl
from jax.experimental.pallas import tpu as pltpu


def _round_up(x, m):
    return ((x + m - 1) // m) * m


def _aug_kernel(theta_ref, coords_ref, x_ref, out_ref, *,
                C, Cl, H, W, contract_x, Hb, Dr_pad):
    """One (batch n, output-pixel tile t) grid step.

    theta_ref : (N, 6) f32 in SMEM
    coords_ref: (2, T) f32  base normalized grid coords [xb; yb]
    x_ref     : (1, Ct, Dr_pad, Dm) bf16 fused image+label block (resident across t)
    out_ref   : (1, Ct, T) f32  merged sampled output (label channel is the raw value)
    """
    n = pl.program_id(0)
    Ct = C + Cl
    Dm = W if contract_x else H            # contraction (MXU) dim

    coords = coords_ref[...]
    xb = coords[0:1, :]                    # (1, T)
    yb = coords[1:2, :]                    # (1, T)
    T = xb.shape[1]

    # theta (2x3) for this batch element, row-major flattened in SMEM.
    t00 = theta_ref[n, 0]; t01 = theta_ref[n, 1]; t02 = theta_ref[n, 2]
    t10 = theta_ref[n, 3]; t11 = theta_ref[n, 4]; t12 = theta_ref[n, 5]

    # F.affine_grid: (gx, gy) = theta @ [x, y, 1]
    gx = t00 * xb + t01 * yb + t02
    gy = t10 * xb + t11 * yb + t12

    # F.grid_sample (bilinear, padding_mode='border', align_corners=False):
    # unnormalize + clamp the sampling coordinate to the valid pixel range (border).
    ix = jnp.clip(((gx + 1.0) * W - 1.0) * 0.5, 0.0, float(W - 1))   # (1, T)
    iy = jnp.clip(((gy + 1.0) * H - 1.0) * 0.5, 0.0, float(H - 1))   # (1, T)

    im = ix if contract_x else iy          # coordinate along the contraction dim
    ir = iy if contract_x else ix          # coordinate along the reduce dim

    # Tent-form bilinear weights along the contraction dim -> bf16 MXU operand.
    # Numerically identical to the floor/compare/select form because the coordinate
    # is border-clamped (wx == 0 exactly when the neighbor would be clamped).
    dm_iota = jax.lax.broadcasted_iota(jnp.int32, (Dm, T), 0).astype(jnp.float32)
    rm = jnp.maximum(1.0 - jnp.abs(dm_iota - im), 0.0).astype(jnp.bfloat16)   # (Dm, T)

    # Chunked contraction + reduce: never materialize a (Ct*Dr, T) intermediate.
    num_chunks = Dr_pad // Hb
    hb_iota = jax.lax.broadcasted_iota(jnp.int32, (Hb, T), 0).astype(jnp.float32)

    def body(c, acc):
        r0 = pl.multiple_of(c * Hb, 16)
        chunk = x_ref[0, :, pl.ds(r0, Hb), :]                         # (Ct, Hb, Dm) bf16
        part = jnp.dot(chunk.reshape(Ct * Hb, Dm), rm,
                       preferred_element_type=jnp.float32)            # (Ct*Hb, T) f32
        # Reduce-dim tent weights for just this chunk of rows; rows past the true
        # extent (zero-padded in the wrapper) get exactly zero weight.
        rr = jnp.maximum(1.0 - jnp.abs((hb_iota + c * Hb) - ir), 0.0)  # (Hb, T) f32
        return acc + jnp.sum(part.reshape(Ct, Hb, T) * rr[None, :, :], axis=1)

    out = jax.lax.fori_loop(0, num_chunks, body,
                            jnp.zeros((Ct, T), jnp.float32), unroll=True)
    out_ref[0] = out


def _pallas_affine_augment(input_g, label_g, theta):
    """input_g: (N,C,H,W) float, label_g: (N,Cl,H,W) any dtype, theta: (N,2,3) f32."""
    N, C, H, W = map(int, input_g.shape)
    Cl = int(label_g.shape[1])
    Ct = C + Cl
    HW = H * W

    # Contract over the larger spatial dim on the MXU, reduce over the smaller on the VPU.
    contract_x = W >= H
    Dm = W if contract_x else H
    Dr = H if contract_x else W
    Hb = min(128, _round_up(Dr, 16))       # reduce-dim chunk (multiple of 16: bf16 sublane tile)
    Dr_pad = _round_up(Dr, Hb)

    # Fused (image ++ label) operand -> (N, Ct, Dr_pad, Dm), bf16 for the MXU.
    # TODO(synk): bf16 quantization of the operands gives ~1e-3 relative error vs the f32
    # PyTorch reference; labels landing exactly on the 0.5 bilinear boundary could flip.
    x = jnp.concatenate([input_g.astype(jnp.float32),
                         label_g.astype(jnp.float32)], axis=1)
    if not contract_x:
        x = jnp.swapaxes(x, 2, 3)          # contract over H, reduce over W
    x = x.astype(jnp.bfloat16)
    if Dr_pad != Dr:
        x = jnp.pad(x, ((0, 0), (0, 0), (0, Dr_pad - Dr), (0, 0)))

    theta_flat = theta.astype(jnp.float32).reshape(N, 6)

    # Generation-aware tile size (v7x: 64 MiB per-TC VMEM, v5e/v6e: 128 MiB).
    try:
        vmem_cap = int(pltpu.get_tpu_info().vmem_capacity_bytes)
    except Exception:
        vmem_cap = 64 * 1024 * 1024
    budget = int(0.45 * vmem_cap)

    def work_bytes(T):
        return (2 * Ct * Dr_pad * Dm * 2   # double-buffered bf16 resident input block
                + 2 * 2 * T * 4            # double-buffered coords block
                + 2 * Ct * T * 4           # double-buffered output block
                + Dm * T * 6               # rm (f32 build + bf16 copy)
                + 2 * Hb * T * 4           # per-chunk rr (+ iota temp)
                + 2 * Ct * Hb * T * 4      # per-chunk matmul result (+ reshape copy)
                + 2 * Ct * T * 4           # accumulator
                + 16 * T * 4)              # misc (1, T) temporaries

    T = max(128, min(2048, _round_up(HW, 128)))
    while T > 128 and work_bytes(T) > budget:
        T -= 128
    HW_pad = _round_up(HW, T)
    num_tiles = HW_pad // T
    # v7x: make sure both TensorCores get work even for N == 1 / a single tile.
    if N * num_tiles < 2 and T > 128:
        T = max(128, _round_up(T // 2, 128))
        HW_pad = _round_up(HW, T)
        num_tiles = HW_pad // T

    # Base output-grid coordinates (align_corners=False), precomputed once; padded tail
    # pixels compute garbage that is discarded after the call.
    p = jnp.arange(HW_pad, dtype=jnp.int32)
    ww = (p % W).astype(jnp.float32)
    hh = (p // W).astype(jnp.float32)
    coords = jnp.stack([(2.0 * ww + 1.0) / W - 1.0,
                        (2.0 * hh + 1.0) / H - 1.0], axis=0)      # (2, HW_pad)

    kernel = functools.partial(_aug_kernel, C=C, Cl=Cl, H=H, W=W,
                               contract_x=contract_x, Hb=Hb, Dr_pad=Dr_pad)

    flops = N * num_tiles * (2 * Ct * Dr_pad * Dm * T
                             + 3 * Ct * Dr_pad * T
                             + 8 * (Dm + Dr_pad) * T)
    bytes_accessed = (N * Ct * Dr_pad * Dm * 2        # bf16 input (resident per n)
                      + N * Ct * HW_pad * 4           # f32 merged output
                      + N * num_tiles * 2 * T * 4     # coords per step
                      + N * 6 * 4)
    cost = pl.CostEstimate(flops=int(flops), transcendentals=0,
                           bytes_accessed=int(bytes_accessed))

    vmem_limit = int(min(int(0.9 * vmem_cap),
                         max(32 * 1024 * 1024, int(1.25 * work_bytes(T)))))

    out = pl.pallas_call(
        kernel,
        grid=(N, num_tiles),
        in_specs=[
            pl.BlockSpec(memory_space=pltpu.SMEM),                         # theta (N, 6)
            pl.BlockSpec((2, T), lambda n, t: (0, t)),                     # base grid coords
            pl.BlockSpec((1, Ct, Dr_pad, Dm), lambda n, t: (n, 0, 0, 0)),  # fused image+label
        ],
        out_specs=pl.BlockSpec((1, Ct, T), lambda n, t: (n, 0, t)),
        out_shape=jax.ShapeDtypeStruct((N, Ct, HW_pad), jnp.float32),
        compiler_params=pltpu.CompilerParams(
            dimension_semantics=("parallel", "parallel"),
            vmem_limit_bytes=vmem_limit),
        cost_estimate=cost,
    )(theta_flat, coords, x)

    out = out[:, :, :HW].reshape(N, Ct, H, W)
    augmented_input = out[:, :C]
    augmented_label = out[:, C:] > 0.5        # reference: grid_sample(label.float()) > 0.5
    return augmented_input, augmented_label


class SegmentationAugmentationPallas:
    """Mirrors SegmentationAugmentation.forward (affine_grid + grid_sample + > 0.5)."""

    def __init__(self, flip=None, offset=None, scale=None, rotate=None, noise=None,
                 rng=None):
        self.flip = flip
        self.offset = offset
        self.scale = scale
        self.rotate = rotate
        # `noise` is accepted but unused, exactly like the reference module's forward.
        self.rng = rng if rng is not None else random.Random(0)

    def _build2dTransformMatrix(self):
        t = np.eye(3, dtype=np.float32)
        for i in range(2):
            if self.flip:
                if self.rng.random() > 0.5:
                    t[i, i] *= -1
            if self.offset:
                random_float = self.rng.random() * 2 - 1
                t[2, i] = self.offset * random_float
            if self.scale:
                random_float = self.rng.random() * 2 - 1
                t[i, i] *= 1.0 + self.scale * random_float
        if self.rotate:
            angle_rad = self.rng.random() * math.pi * 2
            s, c = math.sin(angle_rad), math.cos(angle_rad)
            rot = np.array([[c, -s, 0], [s, c, 0], [0, 0, 1]], dtype=np.float32)
            t = t @ rot
        return t

    def __call__(self, input_g, label_g):
        transform_t = self._build2dTransformMatrix()
        _transform_t_before = self._build2dTransformMatrix()  # built but unused, as in reference
        N = input_g.shape[0]
        # Reference quirk preserved: theta takes rows [:2], dropping row 2 where the
        # translation offsets were written, so `offset` has no effect on the grid.
        theta = jnp.asarray(
            np.broadcast_to(transform_t[:2, :], (N, 2, 3)).astype(np.float32))
        return _pallas_affine_augment(input_g, label_g, theta)


if __name__ == "__main__":
    key = jax.random.PRNGKey(0)
    k1, k2 = jax.random.split(key)
    # small shapes: batch=2, image channels=4, label channels=1, spatial=16x16
    input_g = jax.random.normal(k1, (2, 4, 16, 16), dtype=jnp.float32)
    label_g = jax.random.uniform(k2, (2, 1, 16, 16)) > 0.5    # bool mask

    # Identity-transform sanity check: bilinear weights collapse to exact 0/1 selections,
    # so the output equals the (bf16-quantized) input and the label is reproduced exactly.
    ident = SegmentationAugmentationPallas()   # flip/offset/scale/rotate all None
    id_in, id_lab = ident(input_g, label_g)
    jax.block_until_ready((id_in, id_lab))
    np.testing.assert_allclose(np.asarray(id_in), np.asarray(input_g), atol=3e-2)
    assert bool(jnp.array_equal(id_lab, label_g))

    # Random augmentation run (reference forward semantics).
    aug = SegmentationAugmentationPallas(flip=True, offset=0.1, scale=0.2, rotate=True,
                                         rng=random.Random(0))
    aug_input, aug_label = aug(input_g, label_g)
    jax.block_until_ready((aug_input, aug_label))

    assert aug_input.shape == (2, 4, 16, 16) and aug_input.dtype == jnp.float32
    assert aug_label.shape == (2, 1, 16, 16) and aug_label.dtype == jnp.bool_
    print("KERNEL_OK")
</pallas_src>

<mosaic_0001>
module attributes {stable_mosaic.version = 11 : i64} {
  func.func @_aug_kernel(%arg0: i32, %arg1: i32, %arg2: memref<2x6xf32, #tpu.memory_space<smem>>, %arg3: memref<2x256xf32, #tpu.memory_space<vmem>>, %arg4: memref<1x5x16x16xbf16, #tpu.memory_space<vmem>>, %arg5: memref<1x5x256xf32, #tpu.memory_space<vmem>>) attributes {dimension_semantics = [#tpu.dimension_semantics<parallel>, #tpu.dimension_semantics<parallel>], iteration_bounds = array<i64: 2, 1>, scalar_prefetch = 0 : i64, scratch_operands = 0 : i64, tpu.core_type = #tpu.core_type<tc>, window_params = [{transform_indices = @transform_0, window_bounds = array<i64: 2, 6>}, {transform_indices = @transform_1, window_bounds = array<i64: 2, 256>}, {transform_indices = @transform_2, window_bounds = array<i64: 1, 5, 16, 16>}, {transform_indices = @transform_3, window_bounds = array<i64: 1, 5, 256>}]} {
    %c0 = arith.constant 0 : index
    %c0_0 = arith.constant 0 : index
    %0 = vector.load %arg3[%c0, %c0_0] : memref<2x256xf32, #tpu.memory_space<vmem>>, vector<2x256xf32>
    %1 = vector.extract_strided_slice %0 {offsets = [0, 0], sizes = [1, 256], strides = [1, 1]} : vector<2x256xf32> to vector<1x256xf32>
    %2 = vector.extract_strided_slice %0 {offsets = [1, 0], sizes = [1, 256], strides = [1, 1]} : vector<2x256xf32> to vector<1x256xf32>
    %3 = arith.index_cast %arg0 : i32 to index
    %c0_1 = arith.constant 0 : index
    %4 = memref.load %arg2[%3, %c0_1] : memref<2x6xf32, #tpu.memory_space<smem>>
    %5 = arith.index_cast %arg0 : i32 to index
    %c1 = arith.constant 1 : index
    %6 = memref.load %arg2[%5, %c1] : memref<2x6xf32, #tpu.memory_space<smem>>
    %7 = arith.index_cast %arg0 : i32 to index
    %c2 = arith.constant 2 : index
    %8 = memref.load %arg2[%7, %c2] : memref<2x6xf32, #tpu.memory_space<smem>>
    %9 = arith.index_cast %arg0 : i32 to index
    %c3 = arith.constant 3 : index
    %10 = memref.load %arg2[%9, %c3] : memref<2x6xf32, #tpu.memory_space<smem>>
    %11 = arith.index_cast %arg0 : i32 to index
    %c4 = arith.constant 4 : index
    %12 = memref.load %arg2[%11, %c4] : memref<2x6xf32, #tpu.memory_space<smem>>
    %13 = arith.index_cast %arg0 : i32 to index
    %c5 = arith.constant 5 : index
    %14 = memref.load %arg2[%13, %c5] : memref<2x6xf32, #tpu.memory_space<smem>>
    %15 = vector.broadcast %4 : f32 to vector<1x256xf32>
    %16 = arith.mulf %15, %1 : vector<1x256xf32>
    %17 = vector.broadcast %6 : f32 to vector<1x256xf32>
    %18 = arith.mulf %17, %2 : vector<1x256xf32>
    %19 = arith.addf %16, %18 : vector<1x256xf32>
    %20 = vector.broadcast %8 : f32 to vector<1x256xf32>
    %21 = arith.addf %19, %20 : vector<1x256xf32>
    %22 = vector.broadcast %10 : f32 to vector<1x256xf32>
    %23 = arith.mulf %22, %1 : vector<1x256xf32>
    %24 = vector.broadcast %12 : f32 to vector<1x256xf32>
    %25 = arith.mulf %24, %2 : vector<1x256xf32>
    %26 = arith.addf %23, %25 : vector<1x256xf32>
    %27 = vector.broadcast %14 : f32 to vector<1x256xf32>
    %28 = arith.addf %26, %27 : vector<1x256xf32>
    %cst = arith.constant 1.000000e+00 : f32
    %29 = vector.broadcast %cst : f32 to vector<1x256xf32>
    %30 = arith.addf %21, %29 : vector<1x256xf32>
    %cst_2 = arith.constant 1.600000e+01 : f32
    %31 = vector.broadcast %cst_2 : f32 to vector<1x256xf32>
    %32 = arith.mulf %30, %31 : vector<1x256xf32>
    %cst_3 = arith.constant 1.000000e+00 : f32
    %33 = vector.broadcast %cst_3 : f32 to vector<1x256xf32>
    %34 = arith.subf %32, %33 : vector<1x256xf32>
    %cst_4 = arith.constant 5.000000e-01 : f32
    %35 = vector.broadcast %cst_4 : f32 to vector<1x256xf32>
    %36 = arith.mulf %34, %35 : vector<1x256xf32>
    %cst_5 = arith.constant 0.000000e+00 : f32
    %cst_6 = arith.constant 1.500000e+01 : f32
    %37 = vector.broadcast %cst_5 : f32 to vector<1x256xf32>
    %38 = arith.maximumf %37, %36 : vector<1x256xf32>
    %39 = vector.broadcast %cst_6 : f32 to vector<1x256xf32>
    %40 = arith.minimumf %39, %38 : vector<1x256xf32>
    %cst_7 = arith.constant 1.000000e+00 : f32
    %41 = vector.broadcast %cst_7 : f32 to vector<1x256xf32>
    %42 = arith.addf %28, %41 : vector<1x256xf32>
    %cst_8 = arith.constant 1.600000e+01 : f32
    %43 = vector.broadcast %cst_8 : f32 to vector<1x256xf32>
    %44 = arith.mulf %42, %43 : vector<1x256xf32>
    %cst_9 = arith.constant 1.000000e+00 : f32
    %45 = vector.broadcast %cst_9 : f32 to vector<1x256xf32>
    %46 = arith.subf %44, %45 : vector<1x256xf32>
    %cst_10 = arith.constant 5.000000e-01 : f32
    %47 = vector.broadcast %cst_10 : f32 to vector<1x256xf32>
    %48 = arith.mulf %46, %47 : vector<1x256xf32>
    %cst_11 = arith.constant 0.000000e+00 : f32
    %cst_12 = arith.constant 1.500000e+01 : f32
    %49 = vector.broadcast %cst_11 : f32 to vector<1x256xf32>
    %50 = arith.maximumf %49, %48 : vector<1x256xf32>
    %51 = vector.broadcast %cst_12 : f32 to vector<1x256xf32>
    %52 = arith.minimumf %51, %50 : vector<1x256xf32>
    %53 = tpu.iota {dimensions = array<i32: 0>} : vector<16x256xi32>
    %54 = arith.sitofp %53 : vector<16x256xi32> to vector<16x256xf32>
    %55 = vector.broadcast %40 : vector<1x256xf32> to vector<16x256xf32>
    %56 = arith.subf %54, %55 : vector<16x256xf32>
    %57 = math.absf %56 : vector<16x256xf32>
    %cst_13 = arith.constant 1.000000e+00 : f32
    %58 = vector.broadcast %cst_13 : f32 to vector<16x256xf32>
    %59 = arith.subf %58, %57 : vector<16x256xf32>
    %cst_14 = arith.constant 0.000000e+00 : f32
    %60 = vector.broadcast %cst_14 : f32 to vector<16x256xf32>
    %61 = arith.maximumf %59, %60 : vector<16x256xf32>
    %62 = arith.truncf %61 : vector<16x256xf32> to vector<16x256xbf16>
    %63 = tpu.iota {dimensions = array<i32: 0>} : vector<16x256xi32>
    %64 = arith.sitofp %63 : vector<16x256xi32> to vector<16x256xf32>
    %cst_15 = arith.constant 0.000000e+00 : f32
    %65 = vector.broadcast %cst_15 : f32 to vector<5x256xf32>
    %c0_i32 = arith.constant 0 : i32
    %c16_i32 = arith.constant 16 : i32
    %66 = arith.muli %c0_i32, %c16_i32 : i32
    %67 = tpu.assume_multiple %66, 16 : i32
    %c0_16 = arith.constant 0 : index
    %c0_17 = arith.constant 0 : index
    %68 = arith.index_cast %67 : i32 to index
    %c0_18 = arith.constant 0 : index
    %69 = vector.load %arg4[%c0_16, %c0_17, %68, %c0_18] : memref<1x5x16x16xbf16, #tpu.memory_space<vmem>>, vector<1x5x16x16xbf16>
    %70 = vector.shape_cast %69 : vector<1x5x16x16xbf16> to vector<5x16x16xbf16>
    %71 = vector.shape_cast %70 : vector<5x16x16xbf16> to vector<80x16xbf16>
    %cst_19 = arith.constant dense<0.000000e+00> : vector<80x256xf32>
    %72 = tpu.matmul %71, %62, %cst_19 {dimension_numbers = #tpu.dot_dimension_numbers<[1], [0], [0], [1], [0, 0, 1, 1], [], []>} : vector<80x16xbf16>, vector<16x256xbf16>, vector<80x256xf32> -> vector<80x256xf32>
    %c16_i32_20 = arith.constant 16 : i32
    %73 = arith.muli %c0_i32, %c16_i32_20 : i32
    %74 = arith.sitofp %73 : i32 to f32
    %75 = vector.broadcast %74 : f32 to vector<16x256xf32>
    %76 = arith.addf %64, %75 : vector<16x256xf32>
    %77 = vector.broadcast %52 : vector<1x256xf32> to vector<16x256xf32>
    %78 = arith.subf %76, %77 : vector<16x256xf32>
    %79 = math.absf %78 : vector<16x256xf32>
    %cst_21 = arith.constant 1.000000e+00 : f32
    %80 = vector.broadcast %cst_21 : f32 to vector<16x256xf32>
    %81 = arith.subf %80, %79 : vector<16x256xf32>
    %cst_22 = arith.constant 0.000000e+00 : f32
    %82 = vector.broadcast %cst_22 : f32 to vector<16x256xf32>
    %83 = arith.maximumf %81, %82 : vector<16x256xf32>
    %84 = vector.shape_cast %72 : vector<80x256xf32> to vector<5x16x256xf32>
    %85 = vector.shape_cast %83 : vector<16x256xf32> to vector<1x16x256xf32>
    %86 = vector.broadcast %85 : vector<1x16x256xf32> to vector<5x16x256xf32>
    %87 = arith.mulf %84, %86 : vector<5x16x256xf32>
    %cst_23 = arith.constant dense<0.000000e+00> : vector<5x256xf32>
    %88 = vector.multi_reduction <add>, %87, %cst_23 [1] : vector<5x16x256xf32> to vector<5x256xf32>
    %89 = arith.addf %65, %88 : vector<5x256xf32>
    %c1_i32 = arith.constant 1 : i32
    %c0_24 = arith.constant 0 : index
    %c0_25 = arith.constant 0 : index
    %c0_26 = arith.constant 0 : index
    %90 = vector.load %arg5[%c0_24, %c0_25, %c0_26] : memref<1x5x256xf32, #tpu.memory_space<vmem>>, vector<1x5x256xf32>
    %91 = vector.shape_cast %90 : vector<1x5x256xf32> to vector<5x256xf32>
    %92 = vector.shape_cast %89 : vector<5x256xf32> to vector<1x5x256xf32>
    tpu.vector_store %arg5[%c0_24, %c0_25, %c0_26], %92 {strides = array<i32>} : memref<1x5x256xf32, #tpu.memory_space<vmem>>, vector<1x5x256xf32>,
    return
  }
  func.func @transform_0(%arg0: i32, %arg1: i32) -> (i32, i32) {
    %c0_i32 = arith.constant 0 : i32
    %c0_i32_0 = arith.constant 0 : i32
    %c0_i32_1 = arith.constant 0 : i32
    return %c0_i32, %c0_i32_0 : i32, i32
  }
  func.func @transform_1(%arg0: i32, %arg1: i32) -> (i32, i32) {
    %c0_i32 = arith.constant 0 : i32
    %c0_i32_0 = arith.constant 0 : i32
    return %c0_i32, %arg1 : i32, i32
  }
  func.func @transform_2(%arg0: i32, %arg1: i32) -> (i32, i32, i32, i32) {
    %c0_i32 = arith.constant 0 : i32
    %c0_i32_0 = arith.constant 0 : i32
    %c0_i32_1 = arith.constant 0 : i32
    %c0_i32_2 = arith.constant 0 : i32
    return %arg0, %c0_i32, %c0_i32_0, %c0_i32_1 : i32, i32, i32, i32
  }
  func.func @transform_3(%arg0: i32, %arg1: i32) -> (i32, i32, i32) {
    %c0_i32 = arith.constant 0 : i32
    %c0_i32_0 = arith.constant 0 : i32
    return %arg0, %c0_i32, %arg1 : i32, i32, i32
  }
}

</mosaic_0001>

<llo_original>
// kernel: tpu_custom_call.1
$region0: #{tpu_custom_call.1}
  #allocation0 [shape = 'u32[]', space=smem, size = 0x4, offset = 0x4, fixed_abs, tag = 'smem constant byte address 0x4 - core index']
  #allocation1 [shape = 'u32[144,128]{1,0:T(1,128)}', space=vmem, size = 0x12000, scoped, tag = 'internal scratch']
  %s0 = inlined_call_operand.hbm [shape: f32[2,6], index: 0, kind: input, shape index: {}]
  %s1 = inlined_call_operand.hbm [shape: f32[2,256], index: 1, kind: input, shape index: {}]
  %s2 = inlined_call_operand.hbm [shape: bf16[2,5,16,16], index: 2, kind: input, shape index: {}]
  %s3 = inlined_call_operand.vmem [shape: f32[2,5,256], index: 3, kind: output, shape index: {}]
  %s4 = sld [smem:[#allocation0]]
  $region57: #{tpu_custom_call.1} parent=0
    _
  %s6 = ssub.s32 1, %s4
  %s7 = scalar_select 0, %s6, %s4
  $region1: #{tpu_custom_call.1} parent=0
    #allocation2 [shape = 'u8[1024]{0}', space=smem, size = 0x400, scoped, tag = 'input window, operand 0, single buffered']
    #allocation3 [shape = 's32[2]{0}', space=sflag, size = 0x8, scoped, tag = 'scoped memory for tpu_custom_call.1']
    #allocation4 [shape = 's32[2]{0}', space=sflag, size = 0x8, scoped, tag = 'scoped memory for tpu_custom_call.1']
    #allocation5 [shape = 'u8[2048]{0}', space=vmem, size = 0x800, scoped, tag = 'input window, operand 1, single buffered']
    #allocation6 [shape = 'u8[40960]{0}', space=vmem, size = 0xa000, scoped, tag = 'input window, operand 2']
    #allocation7 [shape = 's32[2]{0}', space=sflag, size = 0x8, scoped, tag = 'scoped memory for tpu_custom_call.1']
    %8 = vsyncpa [#allocation4], 0
    %9 = vsyncpa [#allocation3], 0
    %10 = vsyncpa [#allocation7], 0
    %s11 = scalar_lea.sflag [#allocation7], 1
    %12 = vsyncpa %s11, 0
    loop: start=0, step=1, limit=4
    $region2: #{tpu_custom_call.1} parent=1 // loop_pre_header
      _
    $region3: #{tpu_custom_call.1} parent=1 // loop_header
      %s14 = sphi 0, %s18
      %p15 = scmp.ge.s32.totalorder %s14, 4
      %s21 = sphi 0, %s33
      %s22 = sphi 0, %s29
      %s23 = sphi 0, %s21
      %s24 = sphi 0, %s22
      %s25 = sphi 0, %s23
      %s26 = sphi 0, %s24
      %s34 = sphi 0, %s34
      %s36 = sphi 0, %s34
      %s37 = sphi 0, %s36
      %s51 = sphi 0, %s37
      %s57 = sphi 0, %s59
      %s60 = sphi 0, %s57
      %s61 = sphi 0, %s60
      %s77 = sphi 0, %s61
      %s83 = sphi 0, %s85
      %s86 = sphi 0, %s83
      %s87 = sphi 0, %s86
      %s103 = sphi 0, %s87
      %s111 = sphi 0, %s113
      %s114 = sphi 0, %s111
      %s115 = sphi 0, %s114
      %s131 = sphi 0, %s115
    $region4: #{tpu_custom_call.1} parent=1 // loop_header_branch
      %17 = sbr.rel (%p15) target = $region8
    $region5: #{tpu_custom_call.1} parent=1 // loop_body
      %s19 = ssub.s32 %s14, 1
      %s20 = ssub.s32 %s14, 2
      %s27 = sadd.s32 1, %s22
      %p28 = scmp.ge.s32.totalorder %s27, 1
      %s29 = scalar_select %p28, 0, %s27
      %s30 = sadd.s32 1, %s21
      %s31 = scalar_select %p28, %s30, %s21
      %p32 = scmp.ge.s32.totalorder %s31, 2
      %s33 = scalar_select %p32, 0, %s31
      %s35 = sadd.s32 %s34, 1
      %p38 = scmp.eq.s32.totalorder %s14, 1
      %p39 = scmp.ne.s32.totalorder %s34, %s36
      %p40 = scmp.eq.s32.totalorder %s14, 0
      %p41 = por %p39, %p40
      %p42 = scmp.ne.s32.totalorder %s34, %s36
      %p43 = scmp.eq.s32.totalorder %s19, 1
      %p44 = por %p42, %p43
      %p45 = scmp.ne.s32.totalorder %s36, %s37
      %p46 = scmp.eq.s32.totalorder %s19, 0
      %p47 = por %p45, %p46
      %p48 = scmp.ne.s32.totalorder %s36, %s37
      %p49 = scmp.eq.s32.totalorder %s20, 1
      %p50 = por %p48, %p49
      %p52 = scmp.ne.s32.totalorder %s37, %s51
      %p53 = scmp.eq.s32.totalorder %s20, 0
      %p54 = por %p52, %p53
      %s55 = ssub.s32 %s22, %s29
      %p56 = scmp.eq.s32.totalorder %s55, 0
      %s58 = sadd.s32 %s57, 1
      %s59 = scalar_select %p56, %s57, %s58
      %p62 = pneg %p56
      %p63 = scmp.eq.s32.totalorder %s14, 1
      %p64 = por %p62, %p63
      %p65 = scmp.ne.s32.totalorder %s57, %s60
      %p66 = scmp.eq.s32.totalorder %s14, 0
      %p67 = por %p65, %p66
      %p68 = scmp.ne.s32.totalorder %s57, %s60
      %p69 = scmp.eq.s32.totalorder %s19, 1
      %p70 = por %p68, %p69
      %p71 = scmp.ne.s32.totalorder %s60, %s61
      %p72 = scmp.eq.s32.totalorder %s19, 0
      %p73 = por %p71, %p72
      %p74 = scmp.ne.s32.totalorder %s60, %s61
      %p75 = scmp.eq.s32.totalorder %s20, 1
      %p76 = por %p74, %p75
      %p78 = scmp.ne.s32.totalorder %s61, %s77
      %p79 = scmp.eq.s32.totalorder %s20, 0
      %p80 = por %p78, %p79
      %s81 = ssub.s32 %s21, %s33
      %p82 = scmp.eq.s32.totalorder %s81, 0
      %s84 = sadd.s32 %s83, 1
      %s85 = scalar_select %p82, %s83, %s84
      %p88 = pneg %p82
      %p89 = scmp.eq.s32.totalorder %s14, 1
      %p90 = por %p88, %p89
      %p91 = scmp.ne.s32.totalorder %s83, %s86
      %p92 = scmp.eq.s32.totalorder %s14, 0
      %p93 = por %p91, %p92
      %p94 = scmp.ne.s32.totalorder %s83, %s86
      %p95 = scmp.eq.s32.totalorder %s19, 1
      %p96 = por %p94, %p95
      %p97 = scmp.ne.s32.totalorder %s86, %s87
      %p98 = scmp.eq.s32.totalorder %s19, 0
      %p99 = por %p97, %p98
      %p100 = scmp.ne.s32.totalorder %s86, %s87
      %p101 = scmp.eq.s32.totalorder %s20, 1
      %p102 = por %p100, %p101
      %p104 = scmp.ne.s32.totalorder %s87, %s103
      %p105 = scmp.eq.s32.totalorder %s20, 0
      %p106 = por %p104, %p105
      %s107 = ssub.s32 %s21, %s33
      %s108 = ssub.s32 %s22, %s29
      %s109 = sor.u32 %s107, %s108
      %p110 = scmp.eq.s32.totalorder %s109, 0
      %s112 = sadd.s32 %s111, 1
      %s113 = scalar_select %p110, %s111, %s112
      %p116 = pneg %p110
      %p117 = scmp.eq.s32.totalorder %s14, 1
      %p118 = por %p116, %p117
      %p119 = scmp.ne.s32.totalorder %s111, %s114
      %p120 = scmp.eq.s32.totalorder %s14, 0
      %p121 = por %p119, %p120
      %p122 = scmp.ne.s32.totalorder %s111, %s114
      %p123 = scmp.eq.s32.totalorder %s19, 1
      %p124 = por %p122, %p123
      %p125 = scmp.ne.s32.totalorder %s114, %s115
      %p126 = scmp.eq.s32.totalorder %s19, 0
      %p127 = por %p125, %p126
      %p128 = scmp.ne.s32.totalorder %s114, %s115
      %p129 = scmp.eq.s32.totalorder %s20, 1
      %p130 = por %p128, %p129
      %p132 = scmp.ne.s32.totalorder %s115, %s131
      %p133 = scmp.eq.s32.totalorder %s20, 0
      %p134 = por %p132, %p133
      %p135 = scmp.le.s32.totalorder 1, %s14
      %p136 = scmp.lt.s32.totalorder %s14, 3
      %p137 = pnand %p135, %p136
      %p138 = pneg %p137
      // Predicated region
      $region9: #{tpu_custom_call.1} parent=5 // pred_check
        _
      $region10: #{tpu_custom_call.1} parent=5 // pred_check_branch
        %140 = sbr.rel (%p137) target = $region12
      $region11: #{tpu_custom_call.1} parent=5 // pred_region
        %s141 = ssub.s32 %s14, 1
        // Predicated region
        $region13: #{tpu_custom_call.1} parent=11 // pred_check
          %p142 = pneg %p47
        $region14: #{tpu_custom_call.1} parent=11 // pred_check_branch
          %144 = sbr.rel (%p142) target = $region16
        $region15: #{tpu_custom_call.1} parent=11 // pred_region
          %s146 = ssub.s32 32, 32
          %147 = vsyncadd [#allocation4], %s146
          %150 = dma.hbm_to_smem %s0, 32, [#allocation2], [#allocation4]
        $region16: #{tpu_custom_call.1} parent=11 // pred_fallthru
          _
        // Predicated region
        $region17: #{tpu_custom_call.1} parent=11 // pred_check
          %p151 = pneg %p73
        $region18: #{tpu_custom_call.1} parent=11 // pred_check_branch
          %153 = sbr.rel (%p151) target = $region20
        $region19: #{tpu_custom_call.1} parent=11 // pred_region
          %s154 = smul.u32 2, %s24
          %s156 = ssub.s32 64, 64
          %157 = vsyncadd [#allocation3], %s156
          %s158 = smul.addr %s154, 32
          %s159 = scalar_lea.hbm %s1, %s158
          %s161 = sshll.u32 [#allocation5], 4
          %s162 = int_to_ptr.vmem [resolvable:$true] %s161
          %164 = dma.hbm_to_vmem [thread:$0]  %s159, 64, %s162, [#allocation3]
        $region20: #{tpu_custom_call.1} parent=11 // pred_fallthru
          _
      $region12: #{tpu_custom_call.1} parent=5 // pred_fallthru
        _
      %p165 = scmp.lt.s32.totalorder %s14, 2
      // Predicated region
      $region21: #{tpu_custom_call.1} parent=5 // pred_check
        %p166 = pneg %p165
      $region22: #{tpu_custom_call.1} parent=5 // pred_check_branch
        %168 = sbr.rel (%p166) target = $region24
      $region23: #{tpu_custom_call.1} parent=5 // pred_region
        // Predicated region
        $region25: #{tpu_custom_call.1} parent=23 // pred_check
          %p169 = pneg %p93
        $region26: #{tpu_custom_call.1} parent=23 // pred_check_branch
          %171 = sbr.rel (%p169) target = $region28
        $region27: #{tpu_custom_call.1} parent=23 // pred_region
          %s172 = sand.u32 %s83, 1
          %s173 = scalar_lea.sflag [#allocation7], %s172
          %s174 = sand.u32 %s83, 1
          %s175 = smul.addr %s174, 40
          %s176 = scalar_lea.vmem [#allocation6], %s175
          %s178 = ssub.s32 640, 640
          %179 = vsyncadd %s173, %s178
          %s180 = smul.addr %s21, 10
          %s181 = smul.addr %s180, 64
          %s182 = scalar_lea.hbm %s2, %s181
          %s183 = sshll.u32 %s176, 4
          %s184 = int_to_ptr.vmem [resolvable:$true] %s183
          %189 = dma.hbm_to_vmem [thread:$0]  %s182, 640, %s184, %s173, 64, 64, 4
        $region28: #{tpu_custom_call.1} parent=23 // pred_fallthru
          _
      $region24: #{tpu_custom_call.1} parent=5 // pred_fallthru
        _
      %p190 = scmp.le.s32.totalorder 1, %s14
      %p191 = scmp.lt.s32.totalorder %s14, 3
      %p192 = pnand %p190, %p191
      %p193 = pneg %p192
      // Predicated region
      $region29: #{tpu_custom_call.1} parent=5 // pred_check
        _
      $region30: #{tpu_custom_call.1} parent=5 // pred_check_branch
        %195 = sbr.rel (%p192) target = $region32
      $region31: #{tpu_custom_call.1} parent=5 // pred_region
        %s196 = ssub.s32 %s14, 1
        // Predicated region
        $region33: #{tpu_custom_call.1} parent=31 // pred_check
          %p197 = pneg %p47
        $region34: #{tpu_custom_call.1} parent=31 // pred_check_branch
          %199 = sbr.rel (%p197) target = $region36
        $region35: #{tpu_custom_call.1} parent=31 // pred_region
          %200 = dma.done [#allocation4], 32
        $region36: #{tpu_custom_call.1} parent=31 // pred_fallthru
          _
        // Predicated region
        $region37: #{tpu_custom_call.1} parent=31 // pred_check
          %p201 = pneg %p73
        $region38: #{tpu_custom_call.1} parent=31 // pred_check_branch
          %203 = sbr.rel (%p201) target = $region40
        $region39: #{tpu_custom_call.1} parent=31 // pred_region
          %204 = dma.done [#allocation3], 64
        $region40: #{tpu_custom_call.1} parent=31 // pred_fallthru
          _
        %s205 = sand.u32 %s86, 1
        %s206 = scalar_lea.sflag [#allocation7], %s205
        %s207 = sand.u32 %s86, 1
        %s208 = smul.addr %s207, 40
        %s209 = scalar_lea.vmem [#allocation6], %s208
        // Predicated region
        $region41: #{tpu_custom_call.1} parent=31 // pred_check
          %p210 = pneg %p99
        $region42: #{tpu_custom_call.1} parent=31 // pred_check_branch
          %212 = sbr.rel (%p210) target = $region44
        $region43: #{tpu_custom_call.1} parent=31 // pred_region
          %213 = dma.done %s206, 640
        $region44: #{tpu_custom_call.1} parent=31 // pred_fallthru
          _
        %214 = sfence
        %p215 = pneg %p47
        %p216 = pneg %p44
        %p217 = pneg %p73
        %p218 = pneg %p70
        %s219 = sand.u32 %s86, 1
        %s220 = scalar_lea.sflag [#allocation7], %s219
        %s221 = sand.u32 %s86, 1
        %s222 = smul.addr %s221, 40
        %s223 = scalar_lea.vmem [#allocation6], %s222
        %p224 = pneg %p99
        %p225 = pneg %p96
        %p226 = pneg %p127
        %p227 = pneg %p124
        %s228 = smul.u32 2, %s24
        %p229 = scmp.lt.s32.totalorder %s23, 1
        %s230 = scalar_select %p229, %s23, 1
        %p231 = scmp.lt.s32.totalorder %s228, 1
        %s232 = scalar_select %p231, %s228, 1
        %s233 = smul.addr %s230, 2
        %s234 = sadd.s32 %s232, %s233
        %s235 = smul.addr %s234, 8
        %s236 = scalar_lea.vmem %s3, %s235
        %s237 = smul.u32 2, %s24
        %s238 = smul.u32 2, %s24
        %p239 = scmp.lt.s32.totalorder %s23, 1
        %s240 = scalar_select %p239, %s23, 1
        %p241 = scmp.lt.s32.totalorder %s238, 1
        %s242 = scalar_select %p241, %s238, 1
        %s243 = smul.addr %s240, 2
        %s244 = sadd.s32 %s242, %s243
        %s245 = smul.addr %s244, 8
        %s246 = scalar_lea.vmem %s3, %s245
        %s247 = smul.u32 2, %s24
        %v249 = vld [vmem:[#allocation5] sm:$0xf]
        %s250 = smul.u32 %s23, 128
        %s251 = sld [smem:[#allocation2 + %s250]]
        %s252 = sadd.s32 %s250, 1
        %s253 = sld [smem:[#allocation2 + %s252]]
        %s254 = sadd.s32 %s250, 2
        %s255 = sld [smem:[#allocation2 + %s254]]
        %s256 = sadd.s32 %s250, 3
        %s257 = sld [smem:[#allocation2 + %s256]]
        %s258 = sadd.s32 %s250, 4
        %s259 = sld [smem:[#allocation2 + %s258]]
        %s260 = sadd.s32 %s250, 5
        %s261 = sld [smem:[#allocation2 + %s260]]
        %v262 = vstv %s251
        %v263 = vmul.f32 %v262, %v249
        %v264 = vstv %s253
        %v265 = vmul.f32 %v264, %v249
        %v267 = vrot.slane %v265, 7
        %v268 = vrot.slane %v267, 2
        %v270 = vadd.f32 %v263, %v268
        %v271 = vstv %s255
        %v272 = vadd.f32 %v270, %v271
        %v273 = vstv %s257
        %v274 = vmul.f32 %v273, %v249
        %v275 = vstv %s259
        %v276 = vmul.f32 %v275, %v249
        %v278 = vrot.slane %v276, 7
        %v279 = vrot.slane %v278, 2
        %v281 = vadd.f32 %v274, %v279
        %v282 = vstv %s261
        %v283 = vadd.f32 %v281, %v282
        %v284 = vadd.f32 %v272, 1.0
        %v285 = vmul.f32 %v284, 16.0
        %v286 = vsub.f32 %v285, 1.0
        %v287 = vmul.f32 %v286, 0.5
        %v288 = vmax.f32 %v287, 0.0
        %v289 = vmin.f32 %v288, 15.0
        %v290 = vadd.f32 %v283, 1.0
        %v291 = vmul.f32 %v290, 16.0
        %v292 = vsub.f32 %v291, 1.0
        %v293 = vmul.f32 %v292, 0.5
        %v294 = vmax.f32 %v293, 0.0
        %v295 = vmin.f32 %v294, 15.0
        %v296 = vlaneseq
        %v297 = vshrl.u32 %v296, 7
        %v298 = vadd.s32 %v297, 8
        %v299 = vcvt.s32.f32 %v297
        %v300 = vcvt.s32.f32 %v298
        %v302 = vlaneseq
        %v303 = vshrl.u32 %v302, 7
        %v304 = vsub.s32 0, %v303
        %v305 = vrot.slane %v289, %v304
        %v306 = vlaneseq
        %v307 = vshrl.u32 %v306, 7
        %v308 = vsub.s32 2, %v307
        %v309 = vrot.slane %v289, %v308
        %v312 = vlaneseq
        %v313 = vshrl.u32 %v312, 7
        %v314 = vsub.s32 0, %v313
        %v315 = vrot.slane %v305, %v314
        %v316 = vlaneseq
        %v317 = vshrl.u32 %v316, 7
        %v318 = vsub.s32 0, %v317
        %v319 = vrot.slane %v309, %v318
        %v320 = vsub.f32 %v299, %v315
        %v321 = vsub.f32 %v299, %v319
        %v322 = vsub.f32 %v300, %v315
        %v323 = vsub.f32 %v300, %v319
        %v324 = vand.u32 2147483647, %v320
        %v325 = vand.u32 2147483647, %v321
        %v326 = vand.u32 2147483647, %v322
        %v327 = vand.u32 2147483647, %v323
        %v328 = vsub.f32 1.0, %v324
        %v329 = vsub.f32 1.0, %v325
        %v330 = vsub.f32 1.0, %v326
        %v331 = vsub.f32 1.0, %v327
        %v332 = vmax.f32 %v328, 0.0
        %v333 = vmax.f32 %v329, 0.0
        %v334 = vmax.f32 %v330, 0.0
        %v335 = vmax.f32 %v331, 0.0
        %v336 = vpack.c.bf16 %v334, %v332
        %v337 = vpack.c.bf16 %v335, %v333
        %v338 = vld [vmem:[%s209] sm:$0xf]
        %v339 = vld [vmem:[%s209 + $0x4] sm:$0xf]
        %v340 = vld [vmem:[%s209 + $0x8] sm:$0xf]
        %v341 = vld [vmem:[%s209 + $0xc] sm:$0xf]
        %v342 = vld [vmem:[%s209 + $0x10] sm:$0xf]
        %v343 = vld [vmem:[%s209 + $0x14] sm:$0xf]
        %v344 = vld [vmem:[%s209 + $0x18] sm:$0xf]
        %v345 = vld [vmem:[%s209 + $0x1c] sm:$0xf]
        %v346 = vld [vmem:[%s209 + $0x20] sm:$0xf]
        %v347 = vld [vmem:[%s209 + $0x24] sm:$0xf]
        %v358 = vunpack.c.l.b16 %v338
        %v359 = vunpack.c.l.b16 %v339
        %v360 = vunpack.c.l.b16 %v340
        %v361 = vunpack.c.l.b16 %v341
        %v362 = vunpack.c.l.b16 %v342
        %v363 = vunpack.c.l.b16 %v343
        %v364 = vunpack.c.l.b16 %v344
        %v365 = vunpack.c.l.b16 %v345
        %v366 = vunpack.c.l.b16 %v346
        %v367 = vunpack.c.l.b16 %v347
        %v368 = vpack.c.b16 %v359, %v358
        %v369 = vpack.c.b16 %v361, %v360
        %v370 = vpack.c.b16 %v363, %v362
        %v371 = vpack.c.b16 %v365, %v364
        %v372 = vpack.c.b16 %v367, %v366
        %vm373 = vcmask 130048
        %v375 = vsel %vm373, %v368, 0
        %v378 = vsel %vm373, %v369, 0
        %v381 = vsel %vm373, %v370, 0
        %v384 = vsel %vm373, %v371, 0
        %v387 = vsel %vm373, %v372, 0
        %389 = vmatprep.subr.bf16.mxu0 0
        %390 = vmatpush1.bf16.msra.mxu0 0
        %391 = vmatprep.subr.bf16.mxu0 0
        %392 = vmatpush1.bf16.msra.mxu0 0
        %393 = vmatprep.subr.bf16.mxu0 0
        %394 = vmatpush1.bf16.msra.mxu0 0
        %395 = vmatprep.subr.bf16.mxu0 0
        %396 = vmatpush1.bf16.msra.mxu0 0
        %397 = vmatprep.subr.bf16.mxu0 0
        %398 = vmatpush1.bf16.msra.mxu0 0
        %399 = vmatprep.subr.bf16.mxu0 0
        %400 = vmatpush1.bf16.msra.mxu0 0
        %401 = vmatprep.subr.bf16.mxu0 0
        %402 = vmatpush1.bf16.msra.mxu0 0
        %403 = vmatprep.subr.bf16.mxu0 %v337
        %404 = vmatpush1.bf16.msra.mxu0 %v336
        %405 = vmatprep.subr.bf16.mxu0 0
        %406 = vmatpush2.bf16.msra.mxu0 0
        %407 = vmatprep.subr.bf16.mxu0 0
        %408 = vmatpush2.bf16.msra.mxu0 0
        %409 = vmatprep.subr.bf16.mxu0 0
        %410 = vmatpush2.bf16.msra.mxu0 0
        %411 = vmatprep.subr.bf16.mxu0 0
        %412 = vmatpush2.bf16.msra.mxu0 0
        %413 = vmatprep.subr.bf16.mxu0 0
        %414 = vmatpush2.bf16.msra.mxu0 0
        %415 = vmatprep.subr.bf16.mxu0 0
        %416 = vmatpush2.bf16.msra.mxu0 0
        %417 = vmatprep.subr.bf16.mxu0 0
        %418 = vmatpush2.bf16.msra.mxu0 0
        %419 = vmatprep.subr.bf16.mxu0 0
        %420 = vmatpush2.bf16.msra.mxu0 0
        %421 = vmatprep.mubr.bf16.mxu0 0
        %422 = vmatmul.mubr.bf16.gmra.mxu0 %v375
        %v423 = vpop.f32.mrf.mxu0
        %v424 = vadd.f32 0.0, %v423
        %v425 = vpop.f32.mrf.mxu0
        %v426 = vadd.f32 0.0, %v425
        %v427 = vpop.f32.mrf.mxu0
        %v428 = vadd.f32 0.0, %v427
        %v429 = vpop.f32.mrf.mxu0
        %v430 = vadd.f32 0.0, %v429
        %431 = vmatprep.mubr.bf16.mxu0 0
        %432 = vmatmul.mubr.bf16.gmra.mxu0 %v378
        %v433 = vpop.f32.mrf.mxu0
        %v434 = vadd.f32 0.0, %v433
        %v435 = vpop.f32.mrf.mxu0
        %v436 = vadd.f32 0.0, %v435
        %v437 = vpop.f32.mrf.mxu0
        %v438 = vadd.f32 0.0, %v437
        %v439 = vpop.f32.mrf.mxu0
        %v440 = vadd.f32 0.0, %v439
        %441 = vmatprep.mubr.bf16.mxu0 0
        %442 = vmatmul.mubr.bf16.gmra.mxu0 %v381
        %v443 = vpop.f32.mrf.mxu0
        %v444 = vadd.f32 0.0, %v443
        %v445 = vpop.f32.mrf.mxu0
        %v446 = vadd.f32 0.0, %v445
        %v447 = vpop.f32.mrf.mxu0
        %v448 = vadd.f32 0.0, %v447
        %v449 = vpop.f32.mrf.mxu0
        %v450 = vadd.f32 0.0, %v449
        %451 = vmatprep.mubr.bf16.mxu0 0
        %452 = vmatmul.mubr.bf16.gmra.mxu0 %v384
        %v453 = vpop.f32.mrf.mxu0
        %v454 = vadd.f32 0.0, %v453
        %v455 = vpop.f32.mrf.mxu0
        %v456 = vadd.f32 0.0, %v455
        %v457 = vpop.f32.mrf.mxu0
        %v458 = vadd.f32 0.0, %v457
        %v459 = vpop.f32.mrf.mxu0
        %v460 = vadd.f32 0.0, %v459
        %461 = vmatprep.mubr.bf16.mxu0 0
        %462 = vmatmul.mubr.bf16.gmra.mxu0 %v387
        %v463 = vpop.f32.mrf.mxu0
        %v464 = vadd.f32 0.0, %v463
        %v465 = vpop.f32.mrf.mxu0
        %v466 = vadd.f32 0.0, %v465
        %v467 = vpop.f32.mrf.mxu0
        %v468 = vadd.f32 0.0, %v467
        %v469 = vpop.f32.mrf.mxu0
        %v470 = vadd.f32 0.0, %v469
        %471 = vdwg.mxu0
        %v472 = vadd.f32 %v299, 0.0
        %v473 = vadd.f32 %v300, 0.0
        %v475 = vlaneseq
        %v476 = vshrl.u32 %v475, 7
        %v477 = vsub.s32 0, %v476
        %v478 = vrot.slane %v295, %v477
        %v479 = vlaneseq
        %v480 = vshrl.u32 %v479, 7
        %v481 = vsub.s32 2, %v480
        %v482 = vrot.slane %v295, %v481
        %v485 = vlaneseq
        %v486 = vshrl.u32 %v485, 7
        %v487 = vsub.s32 0, %v486
        %v488 = vrot.slane %v478, %v487
        %v489 = vlaneseq
        %v490 = vshrl.u32 %v489, 7
        %v491 = vsub.s32 0, %v490
        %v492 = vrot.slane %v482, %v491
        %v493 = vsub.f32 %v472, %v488
        %v494 = vsub.f32 %v472, %v492
        %v495 = vsub.f32 %v473, %v488
        %v496 = vsub.f32 %v473, %v492
        %v497 = vand.u32 2147483647, %v493
        %v498 = vand.u32 2147483647, %v494
        %v499 = vand.u32 2147483647, %v495
        %v500 = vand.u32 2147483647, %v496
        %v501 = vsub.f32 1.0, %v497
        %v502 = vsub.f32 1.0, %v498
        %v503 = vsub.f32 1.0, %v499
        %v504 = vsub.f32 1.0, %v500
        %v505 = vmax.f32 %v501, 0.0
        %v506 = vmax.f32 %v502, 0.0
        %v507 = vmax.f32 %v503, 0.0
        %v508 = vmax.f32 %v504, 0.0
        %v509 = vmul.f32 %v424, %v505
        %v510 = vmul.f32 %v426, %v506
        %v511 = vmul.f32 %v428, %v507
        %v512 = vmul.f32 %v430, %v508
        %v513 = vmul.f32 %v434, %v505
        %v514 = vmul.f32 %v436, %v506
        %v515 = vmul.f32 %v438, %v507
        %v516 = vmul.f32 %v440, %v508
        %v517 = vmul.f32 %v444, %v505
        %v518 = vmul.f32 %v446, %v506
        %v519 = vmul.f32 %v448, %v507
        %v520 = vmul.f32 %v450, %v508
        %v521 = vmul.f32 %v454, %v505
        %v522 = vmul.f32 %v456, %v506
        %v523 = vmul.f32 %v458, %v507
        %v524 = vmul.f32 %v460, %v508
        %v525 = vmul.f32 %v464, %v505
        %v526 = vmul.f32 %v466, %v506
        %v527 = vmul.f32 %v468, %v507
        %v528 = vmul.f32 %v470, %v508
        %v529 = vadd.f32 %v509, %v511
        %v530 = vrot.slane %v529, 4
        %v531 = vadd.f32 %v529, %v530
        %v532 = vrot.slane %v531, 2
        %v533 = vadd.f32 %v531, %v532
        %v534 = vrot.slane %v533, 1
        %v535 = vadd.f32 %v533, %v534
        %v536 = vadd.f32 %v510, %v512
        %v537 = vrot.slane %v536, 4
        %v538 = vadd.f32 %v536, %v537
        %v539 = vrot.slane %v538, 2
        %v540 = vadd.f32 %v538, %v539
        %v541 = vrot.slane %v540, 1
        %v542 = vadd.f32 %v540, %v541
        %v543 = vadd.f32 %v513, %v515
        %v544 = vrot.slane %v543, 4
        %v545 = vadd.f32 %v543, %v544
        %v546 = vrot.slane %v545, 2
        %v547 = vadd.f32 %v545, %v546
        %v548 = vrot.slane %v547, 1
        %v549 = vadd.f32 %v547, %v548
        %v550 = vadd.f32 %v514, %v516
        %v551 = vrot.slane %v550, 4
        %v552 = vadd.f32 %v550, %v551
        %v553 = vrot.slane %v552, 2
        %v554 = vadd.f32 %v552, %v553
        %v555 = vrot.slane %v554, 1
        %v556 = vadd.f32 %v554, %v555
        %v557 = vadd.f32 %v517, %v519
        %v558 = vrot.slane %v557, 4
        %v559 = vadd.f32 %v557, %v558
        %v560 = vrot.slane %v559, 2
        %v561 = vadd.f32 %v559, %v560
        %v562 = vrot.slane %v561, 1
        %v563 = vadd.f32 %v561, %v562
        %v564 = vadd.f32 %v518, %v520
        %v565 = vrot.slane %v564, 4
        %v566 = vadd.f32 %v564, %v565
        %v567 = vrot.slane %v566, 2
        %v568 = vadd.f32 %v566, %v567
        %v569 = vrot.slane %v568, 1
        %v570 = vadd.f32 %v568, %v569
        %v571 = vadd.f32 %v521, %v523
        %v572 = vrot.slane %v571, 4
        %v573 = vadd.f32 %v571, %v572
        %v574 = vrot.slane %v573, 2
        %v575 = vadd.f32 %v573, %v574
        %v576 = vrot.slane %v575, 1
        %v577 = vadd.f32 %v575, %v576
        %v578 = vadd.f32 %v522, %v524
        %v579 = vrot.slane %v578, 4
        %v580 = vadd.f32 %v578, %v579
        %v581 = vrot.slane %v580, 2
        %v582 = vadd.f32 %v580, %v581
        %v583 = vrot.slane %v582, 1
        %v584 = vadd.f32 %v582, %v583
        %v585 = vadd.f32 %v525, %v527
        %v586 = vrot.slane %v585, 4
        %v587 = vadd.f32 %v585, %v586
        %v588 = vrot.slane %v587, 2
        %v589 = vadd.f32 %v587, %v588
        %v590 = vrot.slane %v589, 1
        %v591 = vadd.f32 %v589, %v590
        %v592 = vadd.f32 %v526, %v528
        %v593 = vrot.slane %v592, 4
        %v594 = vadd.f32 %v592, %v593
        %v595 = vrot.slane %v594, 2
        %v596 = vadd.f32 %v594, %v595
        %v597 = vrot.slane %v596, 1
        %v598 = vadd.f32 %v596, %v597
        %v599 = vadd.f32 %v535, 0.0
        %v600 = vadd.f32 %v542, 0.0
        %v601 = vadd.f32 %v549, 0.0
        %v602 = vadd.f32 %v556, 0.0
        %v603 = vadd.f32 %v563, 0.0
        %v604 = vadd.f32 %v570, 0.0
        %v605 = vadd.f32 %v577, 0.0
        %v606 = vadd.f32 %v584, 0.0
        %v607 = vadd.f32 %v591, 0.0
        %v608 = vadd.f32 %v598, 0.0
        %vm619 = vcmask 1041409
        %v620 = vsel %vm619, %v601, %v599
        %vm621 = vcmask 1042434
        %v622 = vsel %vm621, %v603, %v620
        %vm623 = vcmask 1043459
        %v624 = vsel %vm623, %v605, %v622
        %vm625 = vcmask 1044484
        %v626 = vsel %vm625, %v607, %v624
        %v627 = vsel %vm619, %v602, %v600
        %v628 = vsel %vm621, %v604, %v627
        %v629 = vsel %vm623, %v606, %v628
        %v630 = vsel %vm625, %v608, %v629
        %633 = vst [vmem:[%s246] sm:$0x1f] %v626
        %634 = vst [vmem:[%s246 + $0x8] sm:$0x1f] %v630
        %s635 = smul.u32 2, %s24
        %p636 = scmp.lt.s32.totalorder %s23, 1
        %s637 = scalar_select %p636, %s23, 1
        %p638 = scmp.lt.s32.totalorder %s635, 1
        %s639 = scalar_select %p638, %s635, 1
        %s640 = smul.addr %s637, 2
        %s641 = sadd.s32 %s639, %s640
        %s642 = smul.addr %s641, 8
        %s643 = scalar_lea.vmem %s3, %s642
        // Predicated region
        $region45: #{tpu_custom_call.1} parent=31 // pred_check
          %p644 = pneg %p124
        $region46: #{tpu_custom_call.1} parent=31 // pred_check_branch
          %646 = sbr.rel (%p644) target = $region48
        $region47: #{tpu_custom_call.1} parent=31 // pred_region
          %s647 = smul.u32 2, %s24
        $region48: #{tpu_custom_call.1} parent=31 // pred_fallthru
          _
      $region32: #{tpu_custom_call.1} parent=5 // pred_fallthru
        _
      %p648 = scmp.le.s32.totalorder 2, %s14
      // Predicated region
      $region49: #{tpu_custom_call.1} parent=5 // pred_check
        %p649 = pneg %p648
      $region50: #{tpu_custom_call.1} parent=5 // pred_check_branch
        %651 = sbr.rel (%p649) target = $region52
      $region51: #{tpu_custom_call.1} parent=5 // pred_region
        %s652 = ssub.s32 %s14, 2
        // Predicated region
        $region53: #{tpu_custom_call.1} parent=51 // pred_check
          %p653 = pneg %p130
        $region54: #{tpu_custom_call.1} parent=51 // pred_check_branch
          %655 = sbr.rel (%p653) target = $region56
        $region55: #{tpu_custom_call.1} parent=51 // pred_region
          %s656 = smul.u32 2, %s26
          %p657 = scmp.lt.s32.totalorder %s25, 1
          %s658 = scalar_select %p657, %s25, 1
          %p659 = scmp.lt.s32.totalorder %s656, 1
          %s660 = scalar_select %p659, %s656, 1
          %s661 = smul.addr %s658, 2
          %s662 = sadd.s32 %s660, %s661
          %s663 = smul.addr %s662, 8
          %s664 = scalar_lea.vmem %s3, %s663
        $region56: #{tpu_custom_call.1} parent=51 // pred_fallthru
          _
      $region52: #{tpu_custom_call.1} parent=5 // pred_fallthru
        _
    $region6: #{tpu_custom_call.1} parent=1 // loop_footer
      %s18 = sadd.s32 1, %s14
    $region7: #{tpu_custom_call.1} parent=1 // loop_footer_branch
      %13 = sbr.rel target = $region3
    $region8: #{tpu_custom_call.1} parent=1 // loop_exit
      _
    %665 = vsyncpa [#allocation3], 1
    %s666 = scalar_lea.sflag [#allocation3], 1
    %667 = vsyncpa %s666, 1
    %668 = vsyncpa [#allocation7], 1
    %s669 = scalar_lea.sflag [#allocation7], 1
    %670 = vsyncpa %s669, 1
    %671 = vsyncpa [#allocation4], 1
    %s672 = scalar_lea.sflag [#allocation4], 1
    %673 = vsyncpa %s672, 1

</llo_original>
